<compile_context>
chip_gen: v5e
topology: v5e:2x2
jax: 0.10.0
libtpu: 0.0.40
codegen_flags: <defaults>
</compile_context>

<pallas_src>
import jax
import jax.numpy as jnp
from jax.experimental import pallas as pl
from jax.experimental.pallas import tpu as pltpu

SUBLANE = 8  # TPU sublane width (second-to-last dim granularity)


def _round_up(n, m):
    return ((n + m - 1) // m) * m


# ----------------------------------------------------------------------------
# Kernel
# ----------------------------------------------------------------------------
def _make_kernel(n_teacher_hidden, n_model_rest, compute_dtype):
    """Fused forward kernel.

    Ref order:
      x_ref,
      (W, b) * n_teacher_hidden,              # teacher Linear -> ReLU each
      W0_gt, [W_fold], b0,                    # fused concat + prediction layer 0
      (W, b) * n_model_rest,                  # rest of prediction MLP
      out_ref
    The first teacher weight has zero rows in the gain/task positions and
    W0_gt has zero rows in the context positions, so both matmuls consume the
    same merged input slab (one DMA stream, no lane-axis slice/concat).
    Biases are f32 and accumulation is f32 (preferred_element_type).
    """

    def kernel(x_ref, *refs):
        out_ref = refs[-1]
        p = refs[:-1]
        idx = 0

        x = x_ref[...]

        # ---- teacher encoder hidden layers (Linear -> ReLU each) ----
        h = x
        for _ in range(n_teacher_hidden):
            w = p[idx][...]
            b = p[idx + 1][...]
            idx += 2
            h = jnp.maximum(
                jnp.dot(h, w, preferred_element_type=jnp.float32) + b,
                0.0).astype(compute_dtype)

        # ---- fused concat + first prediction layer ----
        # (teacher's last activation-free Linear folded into W_fold / b0)
        w_gt = p[idx][...]
        idx += 1
        acc = jnp.dot(x, w_gt, preferred_element_type=jnp.float32)
        if n_teacher_hidden > 0:
            w_fold = p[idx][...]
            idx += 1
            acc = acc + jnp.dot(h, w_fold, preferred_element_type=jnp.float32)
        b0 = p[idx][...]
        idx += 1
        h = acc + b0

        # ---- remaining prediction MLP layers (ReLU between, none at end) ----
        for _ in range(n_model_rest):
            h = jnp.maximum(h, 0.0).astype(compute_dtype)
            w = p[idx][...]
            b = p[idx + 1][...]
            idx += 2
            h = jnp.dot(h, w, preferred_element_type=jnp.float32) + b

        out_ref[...] = h.astype(out_ref.dtype)

    return kernel


# ----------------------------------------------------------------------------
# Batch tile selection
# ----------------------------------------------------------------------------
def _pick_tile_b(batch):
    """Batch tile: large tiles at large batch (amortize ~0.35us/step, ~85% of
    HBM roofline at 512 rows); >= 2 grid steps whenever batch >= 16 so the
    "parallel" grid axis can shard across v7x's two TensorCores."""
    if batch >= 1024:
        return 512
    if batch >= 2 * SUBLANE:
        return min(512, _round_up(-(-batch // 2), SUBLANE))
    # tiny batch: one tile covering everything (block == full dim is legal
    # even when batch is not a multiple of 8)
    return batch


# ----------------------------------------------------------------------------
# Factory: all per-call parameter work hoisted here (runs once)
# ----------------------------------------------------------------------------
def make_teacher_student_forward(teacher_params, model_params, gain_dim,
                                 task_dim, n_targets,
                                 compute_dtype=jnp.float32,
                                 out_dtype=jnp.float32):
    """Build the fused forward for the use_teacher=True, direct=False path.

    teacher_params / model_params: lists of (W [in, out], b [out]).
    compute_dtype=jnp.bfloat16 halves weight/activation streaming bytes
    (recommended on v6e/v7x; keep f32 on v5e). Bias/accumulate stay f32.
    """
    gt_dim = gain_dim + task_dim
    sysid_dim = teacher_params[0][0].shape[0]
    in_dim = gt_dim + sysid_dim

    w_t_last, b_t_last = teacher_params[-1]
    teacher_hidden = teacher_params[:-1]
    w_m0, b_m0 = model_params[0]
    w_m0_gt = w_m0[:gt_dim]                      # [gt_dim, h0]
    w_m0_lat = w_m0[gt_dim:]                     # [latent, h0]
    w_fold = w_t_last @ w_m0_lat                 # [prev,   h0]
    b0 = b_m0 + b_t_last @ w_m0_lat              # [h0]
    model_rest = model_params[1:]
    h0 = w_m0.shape[1]

    flat_params = []
    flat_specs = []

    def add_param(a, dtype):
        a = jnp.asarray(a, dtype)
        flat_params.append(a)
        # block == full array shape, constant block index -> VMEM-resident
        flat_specs.append(pl.BlockSpec(a.shape, lambda i: (0, 0)))

    # Teacher hidden layers; layer 0 consumes the merged input slab, so its
    # weight gets zero rows in the gain/task feature positions.
    for li, (w, b) in enumerate(teacher_hidden):
        if li == 0:
            w = jnp.concatenate(
                [jnp.zeros((gt_dim, w.shape[1]), w.dtype), w], axis=0)
        add_param(w, compute_dtype)
        add_param(b.reshape(1, -1), jnp.float32)

    # Fused first prediction layer.
    if teacher_hidden:
        w_gt_full = jnp.concatenate(
            [w_m0_gt, jnp.zeros((sysid_dim, h0), w_m0.dtype)], axis=0)
        add_param(w_gt_full, compute_dtype)       # [in_dim, h0]
        add_param(w_fold, compute_dtype)          # [prev,   h0]
    else:
        # Teacher is a single Linear: its folded weight acts directly on the
        # context rows of the input slab -> merge with the gain/task weight.
        w_gt_full = jnp.concatenate([w_m0_gt, w_fold], axis=0)
        add_param(w_gt_full, compute_dtype)       # [in_dim, h0]
    add_param(b0.reshape(1, -1), jnp.float32)

    for (w, b) in model_rest:
        add_param(w, compute_dtype)
        add_param(b.reshape(1, -1), jnp.float32)

    flat_params = tuple(flat_params)
    flat_specs = tuple(flat_specs)
    kernel = _make_kernel(len(teacher_hidden), len(model_rest), compute_dtype)

    @jax.jit
    def forward(x):
        assert x.shape[-1] == in_dim, (x.shape, in_dim)
        lead = x.shape[:-1]
        xb = x.reshape(-1, in_dim).astype(compute_dtype)
        batch = xb.shape[0]

        tile_b = _pick_tile_b(batch)
        grid = (pl.cdiv(batch, tile_b),)

        out = pl.pallas_call(
            kernel,
            out_shape=jax.ShapeDtypeStruct((batch, n_targets), out_dtype),
            grid=grid,
            in_specs=[pl.BlockSpec((tile_b, in_dim), lambda i: (i, 0))]
                     + list(flat_specs),
            out_specs=pl.BlockSpec((tile_b, n_targets), lambda i: (i, 0)),
            compiler_params=pltpu.CompilerParams(
                dimension_semantics=("parallel",)),
        )(xb, *flat_params)

        return out.reshape(*lead, n_targets)

    return forward


# ----------------------------------------------------------------------------
# Deterministic parameter construction (synthetic init, no checkpoints)
# ----------------------------------------------------------------------------
def _init_mlp(key, in_dim, out_dim, layer_sizes):
    """Linear(in, ls[0]) -> relu -> ... -> Linear(ls[-1], out)."""
    dims = [in_dim] + list(layer_sizes) + [out_dim]
    params = []
    for i in range(len(dims) - 1):
        key, kw, kb = jax.random.split(key, 3)
        scale = 1.0 / jnp.sqrt(jnp.float32(dims[i]))
        w = jax.random.uniform(kw, (dims[i], dims[i + 1]), jnp.float32,
                               -scale, scale)
        b = jax.random.uniform(kb, (dims[i + 1],), jnp.float32, -scale, scale)
        params.append((w, b))
    return params, key


# ----------------------------------------------------------------------------
# Pure-JAX reference for verification
# ----------------------------------------------------------------------------
def _reference(x, teacher_params, model_params, gain_dim, task_dim):
    gt_dim = gain_dim + task_dim
    gain_and_task = x[:, :gt_dim]
    h = x[:, gt_dim:]
    for i, (w, b) in enumerate(teacher_params):
        h = h @ w + b
        if i < len(teacher_params) - 1:
            h = jnp.maximum(h, 0.0)
    h = jnp.concatenate([gain_and_task, h], axis=-1)
    for i, (w, b) in enumerate(model_params):
        h = h @ w + b
        if i < len(model_params) - 1:
            h = jnp.maximum(h, 0.0)
    return h


# ----------------------------------------------------------------------------
if __name__ == "__main__":
    # Model hyperparameters (small, consistent with the module's __init__).
    gain_dim = 4
    task_dim = 4
    sysid_dim = 8
    history_dim = 16            # only used by encode_student; not in forward
    latent_dim = 8
    n_targets = 4
    layer_sizes = [32, 32]      # prediction MLP hidden sizes
    gt_encoder_layers = [32]    # teacher encoder hidden sizes

    key = jax.random.PRNGKey(0)

    teacher_params, key = _init_mlp(key, sysid_dim, latent_dim,
                                    gt_encoder_layers)
    model_params, key = _init_mlp(key, gain_dim + task_dim + latent_dim,
                                  n_targets, layer_sizes)

    batch = 8
    key, kx = jax.random.split(key)
    x = jax.random.normal(kx, (batch, gain_dim + task_dim + sysid_dim),
                          jnp.float32)

    # All folding / zero-row padding / casting happens once here.
    forward = make_teacher_student_forward(
        teacher_params, model_params, gain_dim, task_dim, n_targets,
        compute_dtype=jnp.float32)   # bf16 recommended on v6e/v7x

    out = forward(x)
    out = jax.block_until_ready(out)

    ref = _reference(x, teacher_params, model_params, gain_dim, task_dim)
    assert out.shape == (batch, n_targets)
    # Folding the teacher's last Linear into layer 0 changes only f32 rounding.
    assert jnp.allclose(out, ref, atol=1e-4, rtol=1e-4), "mismatch vs reference"

    print("KERNEL_OK")
</pallas_src>

<mosaic_0001>
module attributes {stable_mosaic.version = 11 : i64} {
  func.func @kernel(%arg0: i32, %arg1: memref<8x16xf32, #tpu.memory_space<vmem>>, %arg2: memref<16x32xf32, #tpu.memory_space<vmem>>, %arg3: memref<1x32xf32, #tpu.memory_space<vmem>>, %arg4: memref<16x32xf32, #tpu.memory_space<vmem>>, %arg5: memref<32x32xf32, #tpu.memory_space<vmem>>, %arg6: memref<1x32xf32, #tpu.memory_space<vmem>>, %arg7: memref<32x32xf32, #tpu.memory_space<vmem>>, %arg8: memref<1x32xf32, #tpu.memory_space<vmem>>, %arg9: memref<32x4xf32, #tpu.memory_space<vmem>>, %arg10: memref<1x4xf32, #tpu.memory_space<vmem>>, %arg11: memref<8x4xf32, #tpu.memory_space<vmem>>) attributes {dimension_semantics = [#tpu.dimension_semantics<parallel>], iteration_bounds = array<i64: 1>, scalar_prefetch = 0 : i64, scratch_operands = 0 : i64, tpu.core_type = #tpu.core_type<tc>, window_params = [{transform_indices = @transform_0, window_bounds = array<i64: 8, 16>}, {pipeline_mode = #tpu.pipeline_mode<synchronous>, transform_indices = @transform_1, window_bounds = array<i64: 16, 32>}, {pipeline_mode = #tpu.pipeline_mode<synchronous>, transform_indices = @transform_2, window_bounds = array<i64: 1, 32>}, {pipeline_mode = #tpu.pipeline_mode<synchronous>, transform_indices = @transform_3, window_bounds = array<i64: 16, 32>}, {pipeline_mode = #tpu.pipeline_mode<synchronous>, transform_indices = @transform_4, window_bounds = array<i64: 32, 32>}, {pipeline_mode = #tpu.pipeline_mode<synchronous>, transform_indices = @transform_5, window_bounds = array<i64: 1, 32>}, {pipeline_mode = #tpu.pipeline_mode<synchronous>, transform_indices = @transform_6, window_bounds = array<i64: 32, 32>}, {pipeline_mode = #tpu.pipeline_mode<synchronous>, transform_indices = @transform_7, window_bounds = array<i64: 1, 32>}, {pipeline_mode = #tpu.pipeline_mode<synchronous>, transform_indices = @transform_8, window_bounds = array<i64: 32, 4>}, {pipeline_mode = #tpu.pipeline_mode<synchronous>, transform_indices = @transform_9, window_bounds = array<i64: 1, 4>}, {transform_indices = @transform_10, window_bounds = array<i64: 8, 4>}]} {
    %c0 = arith.constant 0 : index
    %c0_0 = arith.constant 0 : index
    %0 = vector.load %arg1[%c0, %c0_0] : memref<8x16xf32, #tpu.memory_space<vmem>>, vector<8x16xf32>
    %c0_1 = arith.constant 0 : index
    %c0_2 = arith.constant 0 : index
    %1 = vector.load %arg2[%c0_1, %c0_2] : memref<16x32xf32, #tpu.memory_space<vmem>>, vector<16x32xf32>
    %c0_3 = arith.constant 0 : index
    %c0_4 = arith.constant 0 : index
    %2 = vector.load %arg3[%c0_3, %c0_4] : memref<1x32xf32, #tpu.memory_space<vmem>>, vector<1x32xf32>
    %cst = arith.constant dense<0.000000e+00> : vector<8x32xf32>
    %3 = tpu.matmul %0, %1, %cst {dimension_numbers = #tpu.dot_dimension_numbers<[1], [0], [0], [1], [0, 0, 1, 1], [], []>} : vector<8x16xf32>, vector<16x32xf32>, vector<8x32xf32> -> vector<8x32xf32>
    %4 = vector.broadcast %2 : vector<1x32xf32> to vector<8x32xf32>
    %5 = arith.addf %3, %4 : vector<8x32xf32>
    %cst_5 = arith.constant 0.000000e+00 : f32
    %6 = vector.broadcast %cst_5 : f32 to vector<8x32xf32>
    %7 = arith.maximumf %5, %6 : vector<8x32xf32>
    %c0_6 = arith.constant 0 : index
    %c0_7 = arith.constant 0 : index
    %8 = vector.load %arg4[%c0_6, %c0_7] : memref<16x32xf32, #tpu.memory_space<vmem>>, vector<16x32xf32>
    %cst_8 = arith.constant dense<0.000000e+00> : vector<8x32xf32>
    %9 = tpu.matmul %0, %8, %cst_8 {dimension_numbers = #tpu.dot_dimension_numbers<[1], [0], [0], [1], [0, 0, 1, 1], [], []>} : vector<8x16xf32>, vector<16x32xf32>, vector<8x32xf32> -> vector<8x32xf32>
    %c0_9 = arith.constant 0 : index
    %c0_10 = arith.constant 0 : index
    %10 = vector.load %arg5[%c0_9, %c0_10] : memref<32x32xf32, #tpu.memory_space<vmem>>, vector<32x32xf32>
    %cst_11 = arith.constant dense<0.000000e+00> : vector<8x32xf32>
    %11 = tpu.matmul %7, %10, %cst_11 {dimension_numbers = #tpu.dot_dimension_numbers<[1], [0], [0], [1], [0, 0, 1, 1], [], []>} : vector<8x32xf32>, vector<32x32xf32>, vector<8x32xf32> -> vector<8x32xf32>
    %12 = arith.addf %9, %11 : vector<8x32xf32>
    %c0_12 = arith.constant 0 : index
    %c0_13 = arith.constant 0 : index
    %13 = vector.load %arg6[%c0_12, %c0_13] : memref<1x32xf32, #tpu.memory_space<vmem>>, vector<1x32xf32>
    %14 = vector.broadcast %13 : vector<1x32xf32> to vector<8x32xf32>
    %15 = arith.addf %12, %14 : vector<8x32xf32>
    %cst_14 = arith.constant 0.000000e+00 : f32
    %16 = vector.broadcast %cst_14 : f32 to vector<8x32xf32>
    %17 = arith.maximumf %15, %16 : vector<8x32xf32>
    %c0_15 = arith.constant 0 : index
    %c0_16 = arith.constant 0 : index
    %18 = vector.load %arg7[%c0_15, %c0_16] : memref<32x32xf32, #tpu.memory_space<vmem>>, vector<32x32xf32>
    %c0_17 = arith.constant 0 : index
    %c0_18 = arith.constant 0 : index
    %19 = vector.load %arg8[%c0_17, %c0_18] : memref<1x32xf32, #tpu.memory_space<vmem>>, vector<1x32xf32>
    %cst_19 = arith.constant dense<0.000000e+00> : vector<8x32xf32>
    %20 = tpu.matmul %17, %18, %cst_19 {dimension_numbers = #tpu.dot_dimension_numbers<[1], [0], [0], [1], [0, 0, 1, 1], [], []>} : vector<8x32xf32>, vector<32x32xf32>, vector<8x32xf32> -> vector<8x32xf32>
    %21 = vector.broadcast %19 : vector<1x32xf32> to vector<8x32xf32>
    %22 = arith.addf %20, %21 : vector<8x32xf32>
    %cst_20 = arith.constant 0.000000e+00 : f32
    %23 = vector.broadcast %cst_20 : f32 to vector<8x32xf32>
    %24 = arith.maximumf %22, %23 : vector<8x32xf32>
    %c0_21 = arith.constant 0 : index
    %c0_22 = arith.constant 0 : index
    %25 = vector.load %arg9[%c0_21, %c0_22] : memref<32x4xf32, #tpu.memory_space<vmem>>, vector<32x4xf32>
    %c0_23 = arith.constant 0 : index
    %c0_24 = arith.constant 0 : index
    %26 = vector.load %arg10[%c0_23, %c0_24] : memref<1x4xf32, #tpu.memory_space<vmem>>, vector<1x4xf32>
    %cst_25 = arith.constant dense<0.000000e+00> : vector<8x4xf32>
    %27 = tpu.matmul %24, %25, %cst_25 {dimension_numbers = #tpu.dot_dimension_numbers<[1], [0], [0], [1], [0, 0, 1, 1], [], []>} : vector<8x32xf32>, vector<32x4xf32>, vector<8x4xf32> -> vector<8x4xf32>
    %28 = vector.broadcast %26 : vector<1x4xf32> to vector<8x4xf32>
    %29 = arith.addf %27, %28 : vector<8x4xf32>
    %c0_26 = arith.constant 0 : index
    %c0_27 = arith.constant 0 : index
    %30 = vector.load %arg11[%c0_26, %c0_27] : memref<8x4xf32, #tpu.memory_space<vmem>>, vector<8x4xf32>
    tpu.vector_store %arg11[%c0_26, %c0_27], %29 {strides = array<i32>} : memref<8x4xf32, #tpu.memory_space<vmem>>, vector<8x4xf32>,
    return
  }
  func.func @transform_0(%arg0: i32) -> (i32, i32) {
    %c0_i32 = arith.constant 0 : i32
    %c0_i32_0 = arith.constant 0 : i32
    return %arg0, %c0_i32 : i32, i32
  }
  func.func @transform_1(%arg0: i32) -> (i32, i32) {
    %c0_i32 = arith.constant 0 : i32
    %c0_i32_0 = arith.constant 0 : i32
    %c0_i32_1 = arith.constant 0 : i32
    return %c0_i32, %c0_i32_0 : i32, i32
  }
  func.func @transform_2(%arg0: i32) -> (i32, i32) {
    %c0_i32 = arith.constant 0 : i32
    %c0_i32_0 = arith.constant 0 : i32
    %c0_i32_1 = arith.constant 0 : i32
    return %c0_i32, %c0_i32_0 : i32, i32
  }
  func.func @transform_3(%arg0: i32) -> (i32, i32) {
    %c0_i32 = arith.constant 0 : i32
    %c0_i32_0 = arith.constant 0 : i32
    %c0_i32_1 = arith.constant 0 : i32
    return %c0_i32, %c0_i32_0 : i32, i32
  }
  func.func @transform_4(%arg0: i32) -> (i32, i32) {
    %c0_i32 = arith.constant 0 : i32
    %c0_i32_0 = arith.constant 0 : i32
    %c0_i32_1 = arith.constant 0 : i32
    return %c0_i32, %c0_i32_0 : i32, i32
  }
  func.func @transform_5(%arg0: i32) -> (i32, i32) {
    %c0_i32 = arith.constant 0 : i32
    %c0_i32_0 = arith.constant 0 : i32
    %c0_i32_1 = arith.constant 0 : i32
    return %c0_i32, %c0_i32_0 : i32, i32
  }
  func.func @transform_6(%arg0: i32) -> (i32, i32) {
    %c0_i32 = arith.constant 0 : i32
    %c0_i32_0 = arith.constant 0 : i32
    %c0_i32_1 = arith.constant 0 : i32
    return %c0_i32, %c0_i32_0 : i32, i32
  }
  func.func @transform_7(%arg0: i32) -> (i32, i32) {
    %c0_i32 = arith.constant 0 : i32
    %c0_i32_0 = arith.constant 0 : i32
    %c0_i32_1 = arith.constant 0 : i32
    return %c0_i32, %c0_i32_0 : i32, i32
  }
  func.func @transform_8(%arg0: i32) -> (i32, i32) {
    %c0_i32 = arith.constant 0 : i32
    %c0_i32_0 = arith.constant 0 : i32
    %c0_i32_1 = arith.constant 0 : i32
    return %c0_i32, %c0_i32_0 : i32, i32
  }
  func.func @transform_9(%arg0: i32) -> (i32, i32) {
    %c0_i32 = arith.constant 0 : i32
    %c0_i32_0 = arith.constant 0 : i32
    %c0_i32_1 = arith.constant 0 : i32
    return %c0_i32, %c0_i32_0 : i32, i32
  }
  func.func @transform_10(%arg0: i32) -> (i32, i32) {
    %c0_i32 = arith.constant 0 : i32
    %c0_i32_0 = arith.constant 0 : i32
    return %arg0, %c0_i32 : i32, i32
  }
}

</mosaic_0001>

<llo_original>
// kernel: forward.1
$region0: #{forward.1}
  #allocation0 [shape = 'u32[]', space=smem, size = 0x4, offset = 0x4, fixed_abs, tag = 'smem constant byte address 0x4 - core index']
  #allocation1 [shape = 'u32[72,128]{1,0:T(1,128)}', space=vmem, size = 0x9000, scoped, tag = 'internal scratch']
  %s0 = inlined_call_operand.hbm [shape: f32[8,16], index: 0, kind: input, shape index: {}]
  %s1 = inlined_call_operand.hbm [shape: f32[16,32], index: 1, kind: input, shape index: {}]
  %s2 = inlined_call_operand.hbm [shape: f32[1,32], index: 2, kind: input, shape index: {}]
  %s3 = inlined_call_operand.hbm [shape: f32[16,32], index: 3, kind: input, shape index: {}]
  %s4 = inlined_call_operand.hbm [shape: f32[32,32], index: 4, kind: input, shape index: {}]
  %s5 = inlined_call_operand.vmem [shape: f32[1,32], index: 5, kind: input, shape index: {}]
  %s6 = inlined_call_operand.hbm [shape: f32[32,32], index: 6, kind: input, shape index: {}]
  %s7 = inlined_call_operand.vmem [shape: f32[1,32], index: 7, kind: input, shape index: {}]
  %s8 = inlined_call_operand.hbm [shape: f32[32,4], index: 8, kind: input, shape index: {}]
  %s9 = inlined_call_operand.vmem [shape: f32[1,4], index: 9, kind: input, shape index: {}]
  %s10 = inlined_call_operand.vmem [shape: f32[8,4], index: 10, kind: output, shape index: {}]
  %s11 = sld [smem:[#allocation0]]
  $region78: #{forward.1} parent=0
    _
  %s13 = ssub.s32 1, %s11
  %s14 = scalar_select 0, %s13, %s11
  $region1: #{forward.1} parent=0
    #allocation2 [shape = 'u8[4096]{0}', space=vmem, size = 0x1000, scoped, tag = 'input window, operand 0, single buffered']
    #allocation3 [shape = 's32[1]{0}', space=sflag, size = 0x4, scoped, tag = 'scoped memory for forward.1']
    #allocation4 [shape = 'u8[8192]{0}', space=vmem, size = 0x2000, scoped, tag = 'input window, operand 1, single buffered']
    #allocation5 [shape = 's32[1]{0}', space=sflag, size = 0x4, scoped, tag = 'scoped memory for forward.1']
    #allocation6 [shape = 'u8[512]{0}', space=vmem, size = 0x400, scoped, tag = 'input window, operand 2, single buffered']
    #allocation7 [shape = 'u8[8192]{0}', space=vmem, size = 0x2000, scoped, tag = 'input window, operand 3, single buffered']
    #allocation8 [shape = 's32[1]{0}', space=sflag, size = 0x4, scoped, tag = 'scoped memory for forward.1']
    #allocation9 [shape = 'u8[16384]{0}', space=vmem, size = 0x4000, scoped, tag = 'input window, operand 4, single buffered']
    #allocation10 [shape = 'u8[16384]{0}', space=vmem, size = 0x4000, scoped, tag = 'input window, operand 6, single buffered']
    #allocation11 [shape = 's32[1]{0}', space=sflag, size = 0x4, scoped, tag = 'scoped memory for forward.1']
    #allocation12 [shape = 'u8[16384]{0}', space=vmem, size = 0x4000, scoped, tag = 'input window, operand 8, single buffered']
    %15 = vsyncpa [#allocation3], 0
    %16 = vsyncpa [#allocation5], 0
    %17 = vsyncpa [#allocation8], 0
    %18 = vsyncpa [#allocation11], 0
    // Predicated region
    $region2: #{forward.1} parent=1 // pred_check
      _
    $region3: #{forward.1} parent=1 // pred_check_branch
      %20 = sbr.rel (0) target = $region5
    $region4: #{forward.1} parent=1 // pred_region
      %22 = vsyncadd [#allocation3], 0
      %s24 = sshll.u32 %s0, 4
      %s25 = int_to_ptr.hbm [resolvable:$true] %s24
      %s26 = sshll.u32 [#allocation2], 4
      %s27 = int_to_ptr.vmem [resolvable:$true] %s26
      %29 = dma.hbm_to_vmem [thread:$0]  %s25, 128, %s27, [#allocation3]
    $region5: #{forward.1} parent=1 // pred_fallthru
      _
    // Predicated region
    $region6: #{forward.1} parent=1 // pred_check
      _
    $region7: #{forward.1} parent=1 // pred_check_branch
      %31 = sbr.rel (0) target = $region9
    $region8: #{forward.1} parent=1 // pred_region
      %33 = vsyncadd [#allocation5], 0
      %s34 = sshll.u32 %s1, 4
      %s35 = int_to_ptr.hbm [resolvable:$true] %s34
      %s36 = sshll.u32 [#allocation4], 4
      %s37 = int_to_ptr.vmem [resolvable:$true] %s36
      %42 = dma.hbm_to_vmem [thread:$0]  %s35, 256, %s37, [#allocation5], 128, 128, 8
    $region9: #{forward.1} parent=1 // pred_fallthru
      _
    // Predicated region
    $region10: #{forward.1} parent=1 // pred_check
      _
    $region11: #{forward.1} parent=1 // pred_check_branch
      %44 = sbr.rel (0) target = $region13
    $region12: #{forward.1} parent=1 // pred_region
      %46 = vsyncadd [#allocation5], 0
      %s48 = sshll.u32 %s2, 4
      %s49 = int_to_ptr.hbm [resolvable:$true] %s48
      %s50 = sshll.u32 [#allocation6], 4
      %s51 = int_to_ptr.vmem [resolvable:$true] %s50
      %53 = dma.hbm_to_vmem [thread:$0]  %s49, 16, %s51, [#allocation5]
    $region13: #{forward.1} parent=1 // pred_fallthru
      _
    // Predicated region
    $region14: #{forward.1} parent=1 // pred_check
      _
    $region15: #{forward.1} parent=1 // pred_check_branch
      %55 = sbr.rel (0) target = $region17
    $region16: #{forward.1} parent=1 // pred_region
      %57 = vsyncadd [#allocation8], 0
      %s58 = sshll.u32 %s3, 4
      %s59 = int_to_ptr.hbm [resolvable:$true] %s58
      %s60 = sshll.u32 [#allocation7], 4
      %s61 = int_to_ptr.vmem [resolvable:$true] %s60
      %66 = dma.hbm_to_vmem [thread:$0]  %s59, 256, %s61, [#allocation8], 128, 128, 8
    $region17: #{forward.1} parent=1 // pred_fallthru
      _
    // Predicated region
    $region18: #{forward.1} parent=1 // pred_check
      _
    $region19: #{forward.1} parent=1 // pred_check_branch
      %68 = sbr.rel (0) target = $region21
    $region20: #{forward.1} parent=1 // pred_region
      %70 = vsyncadd [#allocation8], 0
      %s71 = sshll.u32 %s4, 4
      %s72 = int_to_ptr.hbm [resolvable:$true] %s71
      %s73 = sshll.u32 [#allocation9], 4
      %s74 = int_to_ptr.vmem [resolvable:$true] %s73
      %79 = dma.hbm_to_vmem [thread:$0]  %s72, 512, %s74, [#allocation8], 128, 128, 8
    $region21: #{forward.1} parent=1 // pred_fallthru
      _
    // Predicated region
    $region22: #{forward.1} parent=1 // pred_check
      _
    $region23: #{forward.1} parent=1 // pred_check_branch
      %81 = sbr.rel (0) target = $region25
    $region24: #{forward.1} parent=1 // pred_region
      _
    $region25: #{forward.1} parent=1 // pred_fallthru
      _
    // Predicated region
    $region26: #{forward.1} parent=1 // pred_check
      _
    $region27: #{forward.1} parent=1 // pred_check_branch
      %83 = sbr.rel (0) target = $region29
    $region28: #{forward.1} parent=1 // pred_region
      %85 = vsyncadd [#allocation11], 0
      %s86 = sshll.u32 %s6, 4
      %s87 = int_to_ptr.hbm [resolvable:$true] %s86
      %s88 = sshll.u32 [#allocation10], 4
      %s89 = int_to_ptr.vmem [resolvable:$true] %s88
      %94 = dma.hbm_to_vmem [thread:$0]  %s87, 512, %s89, [#allocation11], 128, 128, 8
    $region29: #{forward.1} parent=1 // pred_fallthru
      _
    // Predicated region
    $region30: #{forward.1} parent=1 // pred_check
      _
    $region31: #{forward.1} parent=1 // pred_check_branch
      %96 = sbr.rel (0) target = $region33
    $region32: #{forward.1} parent=1 // pred_region
      _
    $region33: #{forward.1} parent=1 // pred_fallthru
      _
    // Predicated region
    $region34: #{forward.1} parent=1 // pred_check
      _
    $region35: #{forward.1} parent=1 // pred_check_branch
      %98 = sbr.rel (0) target = $region37
    $region36: #{forward.1} parent=1 // pred_region
      %100 = vsyncadd [#allocation11], 0
      %s101 = sshll.u32 %s8, 4
      %s102 = int_to_ptr.hbm [resolvable:$true] %s101
      %s103 = sshll.u32 [#allocation12], 4
      %s104 = int_to_ptr.vmem [resolvable:$true] %s103
      %109 = dma.hbm_to_vmem [thread:$0]  %s102, 512, %s104, [#allocation11], 128, 128, 8
    $region37: #{forward.1} parent=1 // pred_fallthru
      _
    // Predicated region
    $region38: #{forward.1} parent=1 // pred_check
      _
    $region39: #{forward.1} parent=1 // pred_check_branch
      %111 = sbr.rel (0) target = $region41
    $region40: #{forward.1} parent=1 // pred_region
      _
    $region41: #{forward.1} parent=1 // pred_fallthru
      _
    // Predicated region
    $region42: #{forward.1} parent=1 // pred_check
      _
    $region43: #{forward.1} parent=1 // pred_check_branch
      %113 = sbr.rel (0) target = $region45
    $region44: #{forward.1} parent=1 // pred_region
      %115 = dma.done [#allocation3], 128
    $region45: #{forward.1} parent=1 // pred_fallthru
      _
    // Predicated region
    $region46: #{forward.1} parent=1 // pred_check
      _
    $region47: #{forward.1} parent=1 // pred_check_branch
      %117 = sbr.rel (0) target = $region49
    $region48: #{forward.1} parent=1 // pred_region
      %119 = dma.done [#allocation5], 256
    $region49: #{forward.1} parent=1 // pred_fallthru
      _
    // Predicated region
    $region50: #{forward.1} parent=1 // pred_check
      _
    $region51: #{forward.1} parent=1 // pred_check_branch
      %121 = sbr.rel (0) target = $region53
    $region52: #{forward.1} parent=1 // pred_region
      %123 = dma.done [#allocation5], 16
    $region53: #{forward.1} parent=1 // pred_fallthru
      _
    // Predicated region
    $region54: #{forward.1} parent=1 // pred_check
      _
    $region55: #{forward.1} parent=1 // pred_check_branch
      %125 = sbr.rel (0) target = $region57
    $region56: #{forward.1} parent=1 // pred_region
      %127 = dma.done [#allocation8], 256
    $region57: #{forward.1} parent=1 // pred_fallthru
      _
    // Predicated region
    $region58: #{forward.1} parent=1 // pred_check
      _
    $region59: #{forward.1} parent=1 // pred_check_branch
      %129 = sbr.rel (0) target = $region61
    $region60: #{forward.1} parent=1 // pred_region
      %131 = dma.done [#allocation8], 512
    $region61: #{forward.1} parent=1 // pred_fallthru
      _
    // Predicated region
    $region62: #{forward.1} parent=1 // pred_check
      _
    $region63: #{forward.1} parent=1 // pred_check_branch
      %133 = sbr.rel (0) target = $region65
    $region64: #{forward.1} parent=1 // pred_region
      %135 = dma.done [#allocation11], 512
    $region65: #{forward.1} parent=1 // pred_fallthru
      _
    // Predicated region
    $region66: #{forward.1} parent=1 // pred_check
      _
    $region67: #{forward.1} parent=1 // pred_check_branch
      %137 = sbr.rel (0) target = $region69
    $region68: #{forward.1} parent=1 // pred_region
      %139 = dma.done [#allocation11], 512
    $region69: #{forward.1} parent=1 // pred_fallthru
      _
    %v140 = vld [vmem:[#allocation2] sm:$0xff]
    %v141 = vld [vmem:[#allocation4] sm:$0xff]
    %v142 = vld [vmem:[#allocation4 + $0x8] sm:$0xff]
    %v143 = vld [vmem:[#allocation6] sm:$0x1]
    %v145 = vperm.slane %v143, 0
    %vm147 = vcmask 130048
    %v149 = vsel %vm147, %v140, 0
    %151 = vmatpush.msra.mxu0 0.0
    %152 = vmatpush.msra.mxu0 0.0
    %153 = vmatpush.msra.mxu0 0.0
    %154 = vmatpush.msra.mxu0 0.0
    %155 = vmatpush.msra.mxu0 0.0
    %156 = vmatpush.msra.mxu0 0.0
    %157 = vmatpush.msra.mxu0 0.0
    %158 = vmatpush.msra.mxu0 0.0
    %159 = vmatpush.msra.mxu0 0.0
    %160 = vmatpush.msra.mxu0 0.0
    %161 = vmatpush.msra.mxu0 0.0
    %162 = vmatpush.msra.mxu0 0.0
    %163 = vmatpush.msra.mxu0 0.0
    %164 = vmatpush.msra.mxu0 0.0
    %165 = vmatpush.msra.mxu0 %v142
    %166 = vmatpush.msra.mxu0 %v141
    %167 = vmatmul.f32.gmra.mxu0 %v149
    %v168 = vpop.f32.mrf.mxu0
    %v169 = vadd.f32 %v145, %v168
    %170 = vdwg.mxu0
    %v171 = vmax.f32 %v169, 0.0
    %v172 = vld [vmem:[#allocation7] sm:$0xff]
    %v173 = vld [vmem:[#allocation7 + $0x8] sm:$0xff]
    %v174 = vld [vmem:[#allocation9] sm:$0xff]
    %v175 = vld [vmem:[#allocation9 + $0x8] sm:$0xff]
    %v176 = vld [vmem:[#allocation9 + $0x10] sm:$0xff]
    %v177 = vld [vmem:[#allocation9 + $0x18] sm:$0xff]
    %vm178 = vcmask 261120
    %v180 = vsel %vm178, %v171, 0
    %182 = vmatpush.msra.mxu0 0.0
    %183 = vmatpush.msra.mxu0 0.0
    %184 = vmatpush.msra.mxu0 0.0
    %185 = vmatpush.msra.mxu0 0.0
    %186 = vmatpush.msra.mxu0 0.0
    %187 = vmatpush.msra.mxu0 0.0
    %188 = vmatpush.msra.mxu0 0.0
    %189 = vmatpush.msra.mxu0 0.0
    %190 = vmatpush.msra.mxu0 0.0
    %191 = vmatpush.msra.mxu0 0.0
    %192 = vmatpush.msra.mxu0 0.0
    %193 = vmatpush.msra.mxu0 0.0
    %194 = vmatpush.msra.mxu0 %v177
    %195 = vmatpush.msra.mxu0 %v176
    %196 = vmatpush.msra.mxu0 %v175
    %197 = vmatpush.msra.mxu0 %v174
    %198 = vmatmul.f32.gmra.mxu0 %v180
    %v199 = vpop.f32.mrf.mxu0
    %v200 = vadd.f32 0.0, %v199
    %201 = vdwg.mxu0
    %202 = vmatpush.msra.mxu0 0.0
    %203 = vmatpush.msra.mxu0 0.0
    %204 = vmatpush.msra.mxu0 0.0
    %205 = vmatpush.msra.mxu0 0.0
    %206 = vmatpush.msra.mxu0 0.0
    %207 = vmatpush.msra.mxu0 0.0
    %208 = vmatpush.msra.mxu0 0.0
    %209 = vmatpush.msra.mxu0 0.0
    %210 = vmatpush.msra.mxu0 0.0
    %211 = vmatpush.msra.mxu0 0.0
    %212 = vmatpush.msra.mxu0 0.0
    %213 = vmatpush.msra.mxu0 0.0
    %214 = vmatpush.msra.mxu0 0.0
    %215 = vmatpush.msra.mxu0 0.0
    %216 = vmatpush.msra.mxu0 %v173
    %217 = vmatpush.msra.mxu0 %v172
    %218 = vmatmul.f32.gmra.mxu0 %v149
    %v219 = vpop.f32.mrf.mxu0
    %v220 = vadd.f32 %v200, %v219
    %221 = vdwg.mxu0
    %v222 = vld [vmem:[%s5] sm:$0x1]
    %v224 = vperm.slane %v222, 0
    %v226 = vadd.f32 %v220, %v224
    %v227 = vmax.f32 %v226, 0.0
    %v228 = vld [vmem:[#allocation10] sm:$0xff]
    %v229 = vld [vmem:[#allocation10 + $0x8] sm:$0xff]
    %v230 = vld [vmem:[#allocation10 + $0x10] sm:$0xff]
    %v231 = vld [vmem:[#allocation10 + $0x18] sm:$0xff]
    %v232 = vld [vmem:[%s7] sm:$0x1]
    %v234 = vperm.slane %v232, 0
    %v237 = vsel %vm178, %v227, 0
    %239 = vmatpush.msra.mxu0 0.0
    %240 = vmatpush.msra.mxu0 0.0
    %241 = vmatpush.msra.mxu0 0.0
    %242 = vmatpush.msra.mxu0 0.0
    %243 = vmatpush.msra.mxu0 0.0
    %244 = vmatpush.msra.mxu0 0.0
    %245 = vmatpush.msra.mxu0 0.0
    %246 = vmatpush.msra.mxu0 0.0
    %247 = vmatpush.msra.mxu0 0.0
    %248 = vmatpush.msra.mxu0 0.0
    %249 = vmatpush.msra.mxu0 0.0
    %250 = vmatpush.msra.mxu0 0.0
    %251 = vmatpush.msra.mxu0 %v231
    %252 = vmatpush.msra.mxu0 %v230
    %253 = vmatpush.msra.mxu0 %v229
    %254 = vmatpush.msra.mxu0 %v228
    %255 = vmatmul.f32.gmra.mxu0 %v237
    %v256 = vpop.f32.mrf.mxu0
    %v257 = vadd.f32 %v234, %v256
    %258 = vdwg.mxu0
    %v259 = vmax.f32 %v257, 0.0
    %v260 = vld [vmem:[#allocation12] sm:$0xff]
    %v261 = vld [vmem:[#allocation12 + $0x8] sm:$0xff]
    %v262 = vld [vmem:[#allocation12 + $0x10] sm:$0xff]
    %v263 = vld [vmem:[#allocation12 + $0x18] sm:$0xff]
    %v264 = vld [vmem:[%s9] sm:$0x1]
    %v266 = vperm.slane %v264, 0
    %v269 = vsel %vm178, %v259, 0
    %271 = vmatpush.msra.mxu0 0.0
    %272 = vmatpush.msra.mxu0 0.0
    %273 = vmatpush.msra.mxu0 0.0
    %274 = vmatpush.msra.mxu0 0.0
    %275 = vmatpush.msra.mxu0 0.0
    %276 = vmatpush.msra.mxu0 0.0
    %277 = vmatpush.msra.mxu0 0.0
    %278 = vmatpush.msra.mxu0 0.0
    %279 = vmatpush.msra.mxu0 0.0
    %280 = vmatpush.msra.mxu0 0.0
    %281 = vmatpush.msra.mxu0 0.0
    %282 = vmatpush.msra.mxu0 0.0
    %283 = vmatpush.msra.mxu0 %v263
    %284 = vmatpush.msra.mxu0 %v262
    %285 = vmatpush.msra.mxu0 %v261
    %286 = vmatpush.msra.mxu0 %v260
    %287 = vmatmul.f32.gmra.mxu0 %v269
    %v288 = vpop.f32.mrf.mxu0
    %v289 = vadd.f32 %v266, %v288
    %290 = vdwg.mxu0
    %vm291 = vcmask 31744
    %292 = vst.msk [vmem:[%s10] sm:$0xff] %vm291, %v289
    // Predicated region
    $region70: #{forward.1} parent=1 // pred_check
      _
    $region71: #{forward.1} parent=1 // pred_check_branch
      %294 = sbr.rel (0) target = $region73
    $region72: #{forward.1} parent=1 // pred_region
      _
    $region73: #{forward.1} parent=1 // pred_fallthru
      _
    // Predicated region
    $region74: #{forward.1} parent=1 // pred_check
      _
    $region75: #{forward.1} parent=1 // pred_check_branch
      %296 = sbr.rel (0) target = $region77
    $region76: #{forward.1} parent=1 // pred_region
      _
    $region77: #{forward.1} parent=1 // pred_fallthru
      _
    %297 = vsyncpa [#allocation3], 1
    %298 = vsyncpa [#allocation5], 1
    %299 = vsyncpa [#allocation8], 1
    %300 = vsyncpa [#allocation11], 1

</llo_original>
